<compile_context>
chip_gen: v7x
topology: tpu7x:2x2x1
jax: 0.10.0
libtpu: 0.0.40
codegen_flags: <defaults>
</compile_context>

<pallas_src>
import jax
import jax.numpy as jnp
from jax.experimental import pallas as pl
from jax.experimental.pallas import tpu as pltpu


def _round_up(n, m):
    return ((n + m - 1) // m) * m


def qnet_kernel(xt_ref, at_ref, wst_ref, bs_ref, wa_ref, ba_ref,
                wqs_ref, wqa_ref, bq_ref, wo_ref, bo_ref, out_ref):
    xt = xt_ref[...]                         # [3, TB]   (batch on lanes)
    ws = wst_ref[...]                        # [64, 3]

    # State branch: K=3 contraction as 3 broadcast FMAs (VPU, lane-dense).
    hs = (ws[:, 0:1] * xt[0:1, :]
          + ws[:, 1:2] * xt[1:2, :]
          + ws[:, 2:3] * xt[2:3, :])
    hs = jnp.maximum(hs + bs_ref[...], 0.0)  # [64, TB]

    # Action branch: K=1 outer product (VPU).
    ha = jnp.maximum(wa_ref[...] * at_ref[...] + ba_ref[...], 0.0)  # [64, TB]

    # fc_q on the implicit concat: two half-matmuls accumulated (MXU).
    qh = jnp.dot(wqs_ref[...], hs, preferred_element_type=jnp.float32)
    qh = qh + jnp.dot(wqa_ref[...], ha, preferred_element_type=jnp.float32)
    qh = jnp.maximum(qh + bq_ref[...], 0.0)  # [32, TB]

    # fc_out: M=1 matmul would waste the MXU; VPU multiply + sublane reduce.
    out = jnp.sum(qh * wo_ref[...], axis=0, keepdims=True) + bo_ref[...]  # [1, TB]
    out_ref[...] = out.astype(out_ref.dtype)


def prepare_params(p):
    """Fused / transposed parameter forms, computed ONCE (init / param update),
    not rebuilt inside every forward call."""
    return dict(
        wst=jnp.asarray(p["ws"].T, jnp.float32),        # [64, 3]
        bs=p["bs"].reshape(64, 1).astype(jnp.float32),  # [64, 1]
        wa=jnp.asarray(p["wa"].T, jnp.float32),         # [64, 1]
        ba=p["ba"].reshape(64, 1).astype(jnp.float32),  # [64, 1]
        wqs=jnp.asarray(p["wq"][:64].T, jnp.float32),   # [32, 64] (state half)
        wqa=jnp.asarray(p["wq"][64:].T, jnp.float32),   # [32, 64] (action half)
        bq=p["bq"].reshape(32, 1).astype(jnp.float32),  # [32, 1]
        wo=p["wo"].reshape(32, 1).astype(jnp.float32),  # [32, 1]
        bo=p["bo"].reshape(1, 1).astype(jnp.float32),   # [1, 1]
    )


def qnet_forward(x, a, fp, *, tb_cap=2048):
    """x: [B,3] f32, a: [B,1] f32, fp: prepare_params(...) -> q: [B,1] f32."""
    B = x.shape[0]

    # Lane-dense batch tiling: TB multiple of 128, as large as practical, and
    # >=2 grid steps when the batch allows (v7x megacore 'parallel' sharding).
    Bp0 = _round_up(max(B, 128), 128)
    n_tiles = Bp0 // 128
    if n_tiles <= 1:
        TB = 128
    else:
        steps = max(2, pl.cdiv(Bp0, tb_cap))
        TB = 128 * pl.cdiv(n_tiles, steps)
    Bp = _round_up(Bp0, TB)

    # Transposed activations (batch on lanes); pad batch columns with zeros.
    xt = x.T                                  # [3, B]
    at = a.T                                  # [1, B]
    if Bp != B:
        xt = jnp.pad(xt, ((0, 0), (0, Bp - B)))
        at = jnp.pad(at, ((0, 0), (0, Bp - B)))

    const = lambda shape: pl.BlockSpec(shape, lambda i: (0,) * len(shape))

    out = pl.pallas_call(
        qnet_kernel,
        out_shape=jax.ShapeDtypeStruct((1, Bp), jnp.float32),
        grid=(Bp // TB,),
        in_specs=[
            pl.BlockSpec((3, TB), lambda i: (0, i)),   # x^T, batch-tiled on lanes
            pl.BlockSpec((1, TB), lambda i: (0, i)),   # a^T
            const((64, 3)),                            # ws^T   (VMEM-resident)
            const((64, 1)),                            # bs col
            const((64, 1)),                            # wa col
            const((64, 1)),                            # ba col
            const((32, 64)),                           # wq state-half ^T
            const((32, 64)),                           # wq action-half ^T
            const((32, 1)),                            # bq col
            const((32, 1)),                            # wo col
            const((1, 1)),                             # bo
        ],
        out_specs=pl.BlockSpec((1, TB), lambda i: (0, i)),  # lane-dense output
        compiler_params=pltpu.CompilerParams(
            dimension_semantics=("parallel",),
            vmem_limit_bytes=32 * 1024 * 1024,
        ),
    )(xt, at, fp["wst"], fp["bs"], fp["wa"], fp["ba"],
      fp["wqs"], fp["wqa"], fp["bq"], fp["wo"], fp["bo"])

    return out[:, :B].T                       # back to [B, 1]


def init_params(key):
    """Deterministic init mimicking PyTorch Linear default (U(-1/sqrt(fan_in), +))."""
    def linear(k, fan_in, fan_out):
        k_w, k_b = jax.random.split(k)
        bound = 1.0 / jnp.sqrt(fan_in)
        w = jax.random.uniform(k_w, (fan_in, fan_out), jnp.float32, -bound, bound)
        b = jax.random.uniform(k_b, (fan_out,), jnp.float32, -bound, bound)
        return w, b

    k1, k2, k3, k4 = jax.random.split(key, 4)
    ws, bs = linear(k1, 3, 64)     # fc_s
    wa, ba = linear(k2, 1, 64)     # fc_a
    wq, bq = linear(k3, 128, 32)   # fc_q
    wo, bo = linear(k4, 32, 1)     # fc_out
    return dict(ws=ws, bs=bs, wa=wa, ba=ba, wq=wq, bq=bq, wo=wo, bo=bo)


def qnet_ref(x, a, p):
    """Pure-JAX reference for correctness check."""
    h1 = jnp.maximum(x @ p["ws"] + p["bs"], 0.0)
    h2 = jnp.maximum(a @ p["wa"] + p["ba"], 0.0)
    cat = jnp.concatenate([h1, h2], axis=1)
    q = jnp.maximum(cat @ p["wq"] + p["bq"], 0.0)
    return q @ p["wo"] + p["bo"]


if __name__ == "__main__":
    key = jax.random.PRNGKey(0)
    k_p, k_x, k_a, k_x2, k_a2 = jax.random.split(key, 5)

    params = init_params(k_p)
    fused = prepare_params(params)   # fused/transposed params built once

    # Small rollout-style batch (Pendulum: state dim 3, action dim 1).
    B = 8
    x = jax.random.normal(k_x, (B, 3), jnp.float32)
    a = jax.random.normal(k_a, (B, 1), jnp.float32)
    out = jax.block_until_ready(qnet_forward(x, a, fused))
    ref = qnet_ref(x, a, params)
    assert out.shape == (B, 1)
    assert jnp.allclose(out, ref, atol=1e-4, rtol=1e-4), (out, ref)

    # Training-sized-ish batch exercising the tiled multi-step grid + padding.
    B2 = 300
    x2 = jax.random.normal(k_x2, (B2, 3), jnp.float32)
    a2 = jax.random.normal(k_a2, (B2, 1), jnp.float32)
    out2 = jax.block_until_ready(qnet_forward(x2, a2, fused))
    ref2 = qnet_ref(x2, a2, params)
    assert out2.shape == (B2, 1)
    assert jnp.allclose(out2, ref2, atol=1e-4, rtol=1e-4), (out2, ref2)

    print("KERNEL_OK")
</pallas_src>

<mosaic_0001>
module attributes {stable_mosaic.version = 11 : i64} {
  func.func @qnet_kernel(%arg0: i32, %arg1: memref<3x128xf32, #tpu.memory_space<vmem>>, %arg2: memref<1x128xf32, #tpu.memory_space<vmem>>, %arg3: memref<64x3xf32, #tpu.memory_space<vmem>>, %arg4: memref<64x1xf32, #tpu.memory_space<vmem>>, %arg5: memref<64x1xf32, #tpu.memory_space<vmem>>, %arg6: memref<64x1xf32, #tpu.memory_space<vmem>>, %arg7: memref<32x64xf32, #tpu.memory_space<vmem>>, %arg8: memref<32x64xf32, #tpu.memory_space<vmem>>, %arg9: memref<32x1xf32, #tpu.memory_space<vmem>>, %arg10: memref<32x1xf32, #tpu.memory_space<vmem>>, %arg11: memref<1x1xf32, #tpu.memory_space<vmem>>, %arg12: memref<1x128xf32, #tpu.memory_space<vmem>>) attributes {dimension_semantics = [#tpu.dimension_semantics<parallel>], iteration_bounds = array<i64: 1>, scalar_prefetch = 0 : i64, scratch_operands = 0 : i64, tpu.core_type = #tpu.core_type<tc>, window_params = [{transform_indices = @transform_0, window_bounds = array<i64: 3, 128>}, {transform_indices = @transform_1, window_bounds = array<i64: 1, 128>}, {pipeline_mode = #tpu.pipeline_mode<synchronous>, transform_indices = @transform_2, window_bounds = array<i64: 64, 3>}, {pipeline_mode = #tpu.pipeline_mode<synchronous>, transform_indices = @transform_3, window_bounds = array<i64: 64, 1>}, {pipeline_mode = #tpu.pipeline_mode<synchronous>, transform_indices = @transform_4, window_bounds = array<i64: 64, 1>}, {pipeline_mode = #tpu.pipeline_mode<synchronous>, transform_indices = @transform_5, window_bounds = array<i64: 64, 1>}, {pipeline_mode = #tpu.pipeline_mode<synchronous>, transform_indices = @transform_6, window_bounds = array<i64: 32, 64>}, {pipeline_mode = #tpu.pipeline_mode<synchronous>, transform_indices = @transform_7, window_bounds = array<i64: 32, 64>}, {pipeline_mode = #tpu.pipeline_mode<synchronous>, transform_indices = @transform_8, window_bounds = array<i64: 32, 1>}, {pipeline_mode = #tpu.pipeline_mode<synchronous>, transform_indices = @transform_9, window_bounds = array<i64: 32, 1>}, {pipeline_mode = #tpu.pipeline_mode<synchronous>, transform_indices = @transform_10, window_bounds = array<i64: 1, 1>}, {transform_indices = @transform_11, window_bounds = array<i64: 1, 128>}]} {
    %c0 = arith.constant 0 : index
    %c0_0 = arith.constant 0 : index
    %0 = vector.load %arg1[%c0, %c0_0] : memref<3x128xf32, #tpu.memory_space<vmem>>, vector<3x128xf32>
    %c0_1 = arith.constant 0 : index
    %c0_2 = arith.constant 0 : index
    %1 = vector.load %arg3[%c0_1, %c0_2] : memref<64x3xf32, #tpu.memory_space<vmem>>, vector<64x3xf32>
    %2 = vector.extract_strided_slice %1 {offsets = [0, 0], sizes = [64, 1], strides = [1, 1]} : vector<64x3xf32> to vector<64x1xf32>
    %3 = vector.extract_strided_slice %0 {offsets = [0, 0], sizes = [1, 128], strides = [1, 1]} : vector<3x128xf32> to vector<1x128xf32>
    %4 = vector.broadcast %2 : vector<64x1xf32> to vector<64x128xf32>
    %5 = vector.broadcast %3 : vector<1x128xf32> to vector<64x128xf32>
    %6 = arith.mulf %4, %5 : vector<64x128xf32>
    %7 = vector.extract_strided_slice %1 {offsets = [0, 1], sizes = [64, 1], strides = [1, 1]} : vector<64x3xf32> to vector<64x1xf32>
    %8 = vector.extract_strided_slice %0 {offsets = [1, 0], sizes = [1, 128], strides = [1, 1]} : vector<3x128xf32> to vector<1x128xf32>
    %9 = vector.broadcast %7 : vector<64x1xf32> to vector<64x128xf32>
    %10 = vector.broadcast %8 : vector<1x128xf32> to vector<64x128xf32>
    %11 = arith.mulf %9, %10 : vector<64x128xf32>
    %12 = arith.addf %6, %11 : vector<64x128xf32>
    %13 = vector.extract_strided_slice %1 {offsets = [0, 2], sizes = [64, 1], strides = [1, 1]} : vector<64x3xf32> to vector<64x1xf32>
    %14 = vector.extract_strided_slice %0 {offsets = [2, 0], sizes = [1, 128], strides = [1, 1]} : vector<3x128xf32> to vector<1x128xf32>
    %15 = vector.broadcast %13 : vector<64x1xf32> to vector<64x128xf32>
    %16 = vector.broadcast %14 : vector<1x128xf32> to vector<64x128xf32>
    %17 = arith.mulf %15, %16 : vector<64x128xf32>
    %18 = arith.addf %12, %17 : vector<64x128xf32>
    %c0_3 = arith.constant 0 : index
    %c0_4 = arith.constant 0 : index
    %19 = vector.load %arg4[%c0_3, %c0_4] : memref<64x1xf32, #tpu.memory_space<vmem>>, vector<64x1xf32>
    %20 = vector.broadcast %19 : vector<64x1xf32> to vector<64x128xf32>
    %21 = arith.addf %18, %20 : vector<64x128xf32>
    %cst = arith.constant 0.000000e+00 : f32
    %22 = vector.broadcast %cst : f32 to vector<64x128xf32>
    %23 = arith.maximumf %21, %22 : vector<64x128xf32>
    %c0_5 = arith.constant 0 : index
    %c0_6 = arith.constant 0 : index
    %24 = vector.load %arg5[%c0_5, %c0_6] : memref<64x1xf32, #tpu.memory_space<vmem>>, vector<64x1xf32>
    %c0_7 = arith.constant 0 : index
    %c0_8 = arith.constant 0 : index
    %25 = vector.load %arg2[%c0_7, %c0_8] : memref<1x128xf32, #tpu.memory_space<vmem>>, vector<1x128xf32>
    %26 = vector.broadcast %24 : vector<64x1xf32> to vector<64x128xf32>
    %27 = vector.broadcast %25 : vector<1x128xf32> to vector<64x128xf32>
    %28 = arith.mulf %26, %27 : vector<64x128xf32>
    %c0_9 = arith.constant 0 : index
    %c0_10 = arith.constant 0 : index
    %29 = vector.load %arg6[%c0_9, %c0_10] : memref<64x1xf32, #tpu.memory_space<vmem>>, vector<64x1xf32>
    %30 = vector.broadcast %29 : vector<64x1xf32> to vector<64x128xf32>
    %31 = arith.addf %28, %30 : vector<64x128xf32>
    %cst_11 = arith.constant 0.000000e+00 : f32
    %32 = vector.broadcast %cst_11 : f32 to vector<64x128xf32>
    %33 = arith.maximumf %31, %32 : vector<64x128xf32>
    %c0_12 = arith.constant 0 : index
    %c0_13 = arith.constant 0 : index
    %34 = vector.load %arg7[%c0_12, %c0_13] : memref<32x64xf32, #tpu.memory_space<vmem>>, vector<32x64xf32>
    %cst_14 = arith.constant dense<0.000000e+00> : vector<32x128xf32>
    %35 = tpu.matmul %34, %23, %cst_14 {dimension_numbers = #tpu.dot_dimension_numbers<[1], [0], [0], [1], [0, 0, 1, 1], [], []>} : vector<32x64xf32>, vector<64x128xf32>, vector<32x128xf32> -> vector<32x128xf32>
    %c0_15 = arith.constant 0 : index
    %c0_16 = arith.constant 0 : index
    %36 = vector.load %arg8[%c0_15, %c0_16] : memref<32x64xf32, #tpu.memory_space<vmem>>, vector<32x64xf32>
    %cst_17 = arith.constant dense<0.000000e+00> : vector<32x128xf32>
    %37 = tpu.matmul %36, %33, %cst_17 {dimension_numbers = #tpu.dot_dimension_numbers<[1], [0], [0], [1], [0, 0, 1, 1], [], []>} : vector<32x64xf32>, vector<64x128xf32>, vector<32x128xf32> -> vector<32x128xf32>
    %38 = arith.addf %35, %37 : vector<32x128xf32>
    %c0_18 = arith.constant 0 : index
    %c0_19 = arith.constant 0 : index
    %39 = vector.load %arg9[%c0_18, %c0_19] : memref<32x1xf32, #tpu.memory_space<vmem>>, vector<32x1xf32>
    %40 = vector.broadcast %39 : vector<32x1xf32> to vector<32x128xf32>
    %41 = arith.addf %38, %40 : vector<32x128xf32>
    %cst_20 = arith.constant 0.000000e+00 : f32
    %42 = vector.broadcast %cst_20 : f32 to vector<32x128xf32>
    %43 = arith.maximumf %41, %42 : vector<32x128xf32>
    %c0_21 = arith.constant 0 : index
    %c0_22 = arith.constant 0 : index
    %44 = vector.load %arg10[%c0_21, %c0_22] : memref<32x1xf32, #tpu.memory_space<vmem>>, vector<32x1xf32>
    %45 = vector.broadcast %44 : vector<32x1xf32> to vector<32x128xf32>
    %46 = arith.mulf %43, %45 : vector<32x128xf32>
    %cst_23 = arith.constant dense<0.000000e+00> : vector<128xf32>
    %47 = vector.multi_reduction <add>, %46, %cst_23 [0] : vector<32x128xf32> to vector<128xf32>
    %48 = vector.shape_cast %47 : vector<128xf32> to vector<1x128xf32>
    %c0_24 = arith.constant 0 : index
    %c0_25 = arith.constant 0 : index
    %49 = vector.load %arg11[%c0_24, %c0_25] : memref<1x1xf32, #tpu.memory_space<vmem>>, vector<1x1xf32>
    %50 = vector.broadcast %49 : vector<1x1xf32> to vector<1x128xf32>
    %51 = arith.addf %48, %50 : vector<1x128xf32>
    %c0_26 = arith.constant 0 : index
    %c0_27 = arith.constant 0 : index
    %52 = vector.load %arg12[%c0_26, %c0_27] : memref<1x128xf32, #tpu.memory_space<vmem>>, vector<1x128xf32>
    tpu.vector_store %arg12[%c0_26, %c0_27], %51 {strides = array<i32>} : memref<1x128xf32, #tpu.memory_space<vmem>>, vector<1x128xf32>,
    return
  }
  func.func @transform_0(%arg0: i32) -> (i32, i32) {
    %c0_i32 = arith.constant 0 : i32
    %c0_i32_0 = arith.constant 0 : i32
    return %c0_i32, %arg0 : i32, i32
  }
  func.func @transform_1(%arg0: i32) -> (i32, i32) {
    %c0_i32 = arith.constant 0 : i32
    %c0_i32_0 = arith.constant 0 : i32
    return %c0_i32, %arg0 : i32, i32
  }
  func.func @transform_2(%arg0: i32) -> (i32, i32) {
    %c0_i32 = arith.constant 0 : i32
    %c0_i32_0 = arith.constant 0 : i32
    %c0_i32_1 = arith.constant 0 : i32
    return %c0_i32, %c0_i32_0 : i32, i32
  }
  func.func @transform_3(%arg0: i32) -> (i32, i32) {
    %c0_i32 = arith.constant 0 : i32
    %c0_i32_0 = arith.constant 0 : i32
    %c0_i32_1 = arith.constant 0 : i32
    return %c0_i32, %c0_i32_0 : i32, i32
  }
  func.func @transform_4(%arg0: i32) -> (i32, i32) {
    %c0_i32 = arith.constant 0 : i32
    %c0_i32_0 = arith.constant 0 : i32
    %c0_i32_1 = arith.constant 0 : i32
    return %c0_i32, %c0_i32_0 : i32, i32
  }
  func.func @transform_5(%arg0: i32) -> (i32, i32) {
    %c0_i32 = arith.constant 0 : i32
    %c0_i32_0 = arith.constant 0 : i32
    %c0_i32_1 = arith.constant 0 : i32
    return %c0_i32, %c0_i32_0 : i32, i32
  }
  func.func @transform_6(%arg0: i32) -> (i32, i32) {
    %c0_i32 = arith.constant 0 : i32
    %c0_i32_0 = arith.constant 0 : i32
    %c0_i32_1 = arith.constant 0 : i32
    return %c0_i32, %c0_i32_0 : i32, i32
  }
  func.func @transform_7(%arg0: i32) -> (i32, i32) {
    %c0_i32 = arith.constant 0 : i32
    %c0_i32_0 = arith.constant 0 : i32
    %c0_i32_1 = arith.constant 0 : i32
    return %c0_i32, %c0_i32_0 : i32, i32
  }
  func.func @transform_8(%arg0: i32) -> (i32, i32) {
    %c0_i32 = arith.constant 0 : i32
    %c0_i32_0 = arith.constant 0 : i32
    %c0_i32_1 = arith.constant 0 : i32
    return %c0_i32, %c0_i32_0 : i32, i32
  }
  func.func @transform_9(%arg0: i32) -> (i32, i32) {
    %c0_i32 = arith.constant 0 : i32
    %c0_i32_0 = arith.constant 0 : i32
    %c0_i32_1 = arith.constant 0 : i32
    return %c0_i32, %c0_i32_0 : i32, i32
  }
  func.func @transform_10(%arg0: i32) -> (i32, i32) {
    %c0_i32 = arith.constant 0 : i32
    %c0_i32_0 = arith.constant 0 : i32
    %c0_i32_1 = arith.constant 0 : i32
    return %c0_i32, %c0_i32_0 : i32, i32
  }
  func.func @transform_11(%arg0: i32) -> (i32, i32) {
    %c0_i32 = arith.constant 0 : i32
    %c0_i32_0 = arith.constant 0 : i32
    return %c0_i32, %arg0 : i32, i32
  }
}

</mosaic_0001>

<llo_original>
// kernel: tpu_custom_call.1
$region0: #{tpu_custom_call.1}
  #allocation0 [shape = 'u32[]', space=smem, size = 0x4, offset = 0x4, fixed_abs, tag = 'smem constant byte address 0x4 - core index']
  #allocation1 [shape = 'u32[144,128]{1,0:T(1,128)}', space=vmem, size = 0x12000, scoped, tag = 'internal scratch']
  #allocation2 [shape = 'f32[1,1]{1,0:T(1,128)S(1)}', space=vmem, size = 0x200, scoped, tag = 'scoped memory for tpu_custom_call.1']
  %s0 = inlined_call_operand.vmem [shape: f32[3,128], index: 0, kind: input, shape index: {}]
  %s1 = inlined_call_operand.vmem [shape: f32[1,128], index: 1, kind: input, shape index: {}]
  %s2 = inlined_call_operand.vmem [shape: f32[64,3], index: 2, kind: input, shape index: {}]
  %s3 = inlined_call_operand.vmem [shape: f32[64,1], index: 3, kind: input, shape index: {}]
  %s4 = inlined_call_operand.vmem [shape: f32[64,1], index: 4, kind: input, shape index: {}]
  %s5 = inlined_call_operand.vmem [shape: f32[64,1], index: 5, kind: input, shape index: {}]
  %s6 = inlined_call_operand.vmem [shape: f32[32,64], index: 6, kind: input, shape index: {}]
  %s7 = inlined_call_operand.vmem [shape: f32[32,64], index: 7, kind: input, shape index: {}]
  %s8 = inlined_call_operand.vmem [shape: f32[32,1], index: 8, kind: input, shape index: {}]
  %s9 = inlined_call_operand.vmem [shape: f32[32,1], index: 9, kind: input, shape index: {}]
  %s10 = inlined_call_operand.<no memory space> [shape: f32[1,1], index: 10, kind: input, shape index: {}]
  %s11 = inlined_call_operand.hbm [shape: f32[1,128], index: 11, kind: output, shape index: {}]
  %s12 = sld [smem:[#allocation0]]
  $region54: #{tpu_custom_call.1} parent=0
    _
  %s14 = ssub.s32 1, %s12
  %s15 = scalar_select 0, %s14, %s12
  %v16 = vstv %s10
  %17 = vst [vmem:[#allocation2] sm:$0x1] %v16
  $region1: #{tpu_custom_call.1} parent=0
    #allocation3 [shape = 'u8[512]{0}', space=vmem, size = 0x400, scoped, tag = 'output window, operand 0, single buffered']
    #allocation4 [shape = 's32[1]{0}', space=sflag, size = 0x4, scoped, tag = 'scoped memory for tpu_custom_call.1']
    %18 = vsyncpa [#allocation4], 0
    // Predicated region
    $region2: #{tpu_custom_call.1} parent=1 // pred_check
      _
    $region3: #{tpu_custom_call.1} parent=1 // pred_check_branch
      %20 = sbr.rel (0) target = $region5
    $region4: #{tpu_custom_call.1} parent=1 // pred_region
      _
    $region5: #{tpu_custom_call.1} parent=1 // pred_fallthru
      _
    // Predicated region
    $region6: #{tpu_custom_call.1} parent=1 // pred_check
      _
    $region7: #{tpu_custom_call.1} parent=1 // pred_check_branch
      %22 = sbr.rel (0) target = $region9
    $region8: #{tpu_custom_call.1} parent=1 // pred_region
      _
    $region9: #{tpu_custom_call.1} parent=1 // pred_fallthru
      _
    // Predicated region
    $region10: #{tpu_custom_call.1} parent=1 // pred_check
      _
    $region11: #{tpu_custom_call.1} parent=1 // pred_check_branch
      %24 = sbr.rel (0) target = $region13
    $region12: #{tpu_custom_call.1} parent=1 // pred_region
      _
    $region13: #{tpu_custom_call.1} parent=1 // pred_fallthru
      _
    // Predicated region
    $region14: #{tpu_custom_call.1} parent=1 // pred_check
      _
    $region15: #{tpu_custom_call.1} parent=1 // pred_check_branch
      %26 = sbr.rel (0) target = $region17
    $region16: #{tpu_custom_call.1} parent=1 // pred_region
      _
    $region17: #{tpu_custom_call.1} parent=1 // pred_fallthru
      _
    // Predicated region
    $region18: #{tpu_custom_call.1} parent=1 // pred_check
      _
    $region19: #{tpu_custom_call.1} parent=1 // pred_check_branch
      %28 = sbr.rel (0) target = $region21
    $region20: #{tpu_custom_call.1} parent=1 // pred_region
      _
    $region21: #{tpu_custom_call.1} parent=1 // pred_fallthru
      _
    // Predicated region
    $region22: #{tpu_custom_call.1} parent=1 // pred_check
      _
    $region23: #{tpu_custom_call.1} parent=1 // pred_check_branch
      %30 = sbr.rel (0) target = $region25
    $region24: #{tpu_custom_call.1} parent=1 // pred_region
      _
    $region25: #{tpu_custom_call.1} parent=1 // pred_fallthru
      _
    // Predicated region
    $region26: #{tpu_custom_call.1} parent=1 // pred_check
      _
    $region27: #{tpu_custom_call.1} parent=1 // pred_check_branch
      %32 = sbr.rel (0) target = $region29
    $region28: #{tpu_custom_call.1} parent=1 // pred_region
      _
    $region29: #{tpu_custom_call.1} parent=1 // pred_fallthru
      _
    // Predicated region
    $region30: #{tpu_custom_call.1} parent=1 // pred_check
      _
    $region31: #{tpu_custom_call.1} parent=1 // pred_check_branch
      %34 = sbr.rel (0) target = $region33
    $region32: #{tpu_custom_call.1} parent=1 // pred_region
      _
    $region33: #{tpu_custom_call.1} parent=1 // pred_fallthru
      _
    // Predicated region
    $region34: #{tpu_custom_call.1} parent=1 // pred_check
      _
    $region35: #{tpu_custom_call.1} parent=1 // pred_check_branch
      %36 = sbr.rel (0) target = $region37
    $region36: #{tpu_custom_call.1} parent=1 // pred_region
      _
    $region37: #{tpu_custom_call.1} parent=1 // pred_fallthru
      _
    // Predicated region
    $region38: #{tpu_custom_call.1} parent=1 // pred_check
      _
    $region39: #{tpu_custom_call.1} parent=1 // pred_check_branch
      %38 = sbr.rel (0) target = $region41
    $region40: #{tpu_custom_call.1} parent=1 // pred_region
      _
    $region41: #{tpu_custom_call.1} parent=1 // pred_fallthru
      _
    // Predicated region
    $region42: #{tpu_custom_call.1} parent=1 // pred_check
      _
    $region43: #{tpu_custom_call.1} parent=1 // pred_check_branch
      %40 = sbr.rel (0) target = $region45
    $region44: #{tpu_custom_call.1} parent=1 // pred_region
      _
    $region45: #{tpu_custom_call.1} parent=1 // pred_fallthru
      _
    %v41 = vld [vmem:[%s0] sm:$0x7]
    %v42 = vld [vmem:[%s2] sm:$0xff]
    %v43 = vld [vmem:[%s2 + $0x8] sm:$0xff]
    %v44 = vld [vmem:[%s2 + $0x10] sm:$0xff]
    %v45 = vld [vmem:[%s2 + $0x18] sm:$0xff]
    %v46 = vld [vmem:[%s2 + $0x20] sm:$0xff]
    %v47 = vld [vmem:[%s2 + $0x28] sm:$0xff]
    %v48 = vld [vmem:[%s2 + $0x30] sm:$0xff]
    %v49 = vld [vmem:[%s2 + $0x38] sm:$0xff]
    %51 = vset.pattern.permute.xlu0 0
    %52 = vperm.xlu0 %51, %v42
    %v53 = vpop.permute.xlu0 %52
    %56 = vset.pattern.permute.xlu0 0
    %57 = vperm.xlu0 %56, %v43
    %v58 = vpop.permute.xlu0 %57
    %61 = vset.pattern.permute.xlu0 0
    %62 = vperm.xlu0 %61, %v44
    %v63 = vpop.permute.xlu0 %62
    %66 = vset.pattern.permute.xlu0 0
    %67 = vperm.xlu0 %66, %v45
    %v68 = vpop.permute.xlu0 %67
    %71 = vset.pattern.permute.xlu0 0
    %72 = vperm.xlu0 %71, %v46
    %v73 = vpop.permute.xlu0 %72
    %76 = vset.pattern.permute.xlu0 0
    %77 = vperm.xlu0 %76, %v47
    %v78 = vpop.permute.xlu0 %77
    %81 = vset.pattern.permute.xlu0 0
    %82 = vperm.xlu0 %81, %v48
    %v83 = vpop.permute.xlu0 %82
    %86 = vset.pattern.permute.xlu0 0
    %87 = vperm.xlu0 %86, %v49
    %v88 = vpop.permute.xlu0 %87
    %v90 = vlaneseq
    %v91 = vshrl.u32 %v90, 7
    %v92 = vsub.s32 0, %v91
    %v93 = vrot.slane %v41, %v92
    %v94 = vmul.f32 %v53, %v93
    %v95 = vmul.f32 %v58, %v93
    %v96 = vmul.f32 %v63, %v93
    %v97 = vmul.f32 %v68, %v93
    %v98 = vmul.f32 %v73, %v93
    %v99 = vmul.f32 %v78, %v93
    %v100 = vmul.f32 %v83, %v93
    %v101 = vmul.f32 %v88, %v93
    %102 = vset.pattern.permute.xlu0 1
    %103 = vperm.xlu0 %102, %v42
    %v104 = vpop.permute.xlu0 %103
    %106 = vset.pattern.permute.xlu0 1
    %107 = vperm.xlu0 %106, %v43
    %v108 = vpop.permute.xlu0 %107
    %110 = vset.pattern.permute.xlu0 1
    %111 = vperm.xlu0 %110, %v44
    %v112 = vpop.permute.xlu0 %111
    %114 = vset.pattern.permute.xlu0 1
    %115 = vperm.xlu0 %114, %v45
    %v116 = vpop.permute.xlu0 %115
    %118 = vset.pattern.permute.xlu0 1
    %119 = vperm.xlu0 %118, %v46
    %v120 = vpop.permute.xlu0 %119
    %122 = vset.pattern.permute.xlu0 1
    %123 = vperm.xlu0 %122, %v47
    %v124 = vpop.permute.xlu0 %123
    %126 = vset.pattern.permute.xlu0 1
    %127 = vperm.xlu0 %126, %v48
    %v128 = vpop.permute.xlu0 %127
    %130 = vset.pattern.permute.xlu0 1
    %131 = vperm.xlu0 %130, %v49
    %v132 = vpop.permute.xlu0 %131
    %v134 = vlaneseq
    %v135 = vshrl.u32 %v134, 7
    %v136 = vsub.s32 1, %v135
    %v137 = vrot.slane %v41, %v136
    %v138 = vmul.f32 %v104, %v137
    %v139 = vmul.f32 %v108, %v137
    %v140 = vmul.f32 %v112, %v137
    %v141 = vmul.f32 %v116, %v137
    %v142 = vmul.f32 %v120, %v137
    %v143 = vmul.f32 %v124, %v137
    %v144 = vmul.f32 %v128, %v137
    %v145 = vmul.f32 %v132, %v137
    %v146 = vadd.f32 %v94, %v138
    %v147 = vadd.f32 %v95, %v139
    %v148 = vadd.f32 %v96, %v140
    %v149 = vadd.f32 %v97, %v141
    %v150 = vadd.f32 %v98, %v142
    %v151 = vadd.f32 %v99, %v143
    %v152 = vadd.f32 %v100, %v144
    %v153 = vadd.f32 %v101, %v145
    %154 = vset.pattern.permute.xlu0 2
    %155 = vperm.xlu0 %154, %v42
    %v156 = vpop.permute.xlu0 %155
    %158 = vset.pattern.permute.xlu0 2
    %159 = vperm.xlu0 %158, %v43
    %v160 = vpop.permute.xlu0 %159
    %162 = vset.pattern.permute.xlu0 2
    %163 = vperm.xlu0 %162, %v44
    %v164 = vpop.permute.xlu0 %163
    %166 = vset.pattern.permute.xlu0 2
    %167 = vperm.xlu0 %166, %v45
    %v168 = vpop.permute.xlu0 %167
    %170 = vset.pattern.permute.xlu0 2
    %171 = vperm.xlu0 %170, %v46
    %v172 = vpop.permute.xlu0 %171
    %174 = vset.pattern.permute.xlu0 2
    %175 = vperm.xlu0 %174, %v47
    %v176 = vpop.permute.xlu0 %175
    %178 = vset.pattern.permute.xlu0 2
    %179 = vperm.xlu0 %178, %v48
    %v180 = vpop.permute.xlu0 %179
    %182 = vset.pattern.permute.xlu0 2
    %183 = vperm.xlu0 %182, %v49
    %v184 = vpop.permute.xlu0 %183
    %v186 = vlaneseq
    %v187 = vshrl.u32 %v186, 7
    %v188 = vsub.s32 2, %v187
    %v189 = vrot.slane %v41, %v188
    %v190 = vmul.f32 %v156, %v189
    %v191 = vmul.f32 %v160, %v189
    %v192 = vmul.f32 %v164, %v189
    %v193 = vmul.f32 %v168, %v189
    %v194 = vmul.f32 %v172, %v189
    %v195 = vmul.f32 %v176, %v189
    %v196 = vmul.f32 %v180, %v189
    %v197 = vmul.f32 %v184, %v189
    %v198 = vadd.f32 %v146, %v190
    %v199 = vadd.f32 %v147, %v191
    %v200 = vadd.f32 %v148, %v192
    %v201 = vadd.f32 %v149, %v193
    %v202 = vadd.f32 %v150, %v194
    %v203 = vadd.f32 %v151, %v195
    %v204 = vadd.f32 %v152, %v196
    %v205 = vadd.f32 %v153, %v197
    %v206 = vld [vmem:[%s3] sm:$0xff]
    %v207 = vld [vmem:[%s3 + $0x8] sm:$0xff]
    %v208 = vld [vmem:[%s3 + $0x10] sm:$0xff]
    %v209 = vld [vmem:[%s3 + $0x18] sm:$0xff]
    %v210 = vld [vmem:[%s3 + $0x20] sm:$0xff]
    %v211 = vld [vmem:[%s3 + $0x28] sm:$0xff]
    %v212 = vld [vmem:[%s3 + $0x30] sm:$0xff]
    %v213 = vld [vmem:[%s3 + $0x38] sm:$0xff]
    %215 = vset.pattern.permute.xlu0 0
    %216 = vperm.xlu0 %215, %v206
    %v217 = vpop.permute.xlu0 %216
    %220 = vset.pattern.permute.xlu0 0
    %221 = vperm.xlu0 %220, %v207
    %v222 = vpop.permute.xlu0 %221
    %225 = vset.pattern.permute.xlu0 0
    %226 = vperm.xlu0 %225, %v208
    %v227 = vpop.permute.xlu0 %226
    %230 = vset.pattern.permute.xlu0 0
    %231 = vperm.xlu0 %230, %v209
    %v232 = vpop.permute.xlu0 %231
    %235 = vset.pattern.permute.xlu0 0
    %236 = vperm.xlu0 %235, %v210
    %v237 = vpop.permute.xlu0 %236
    %240 = vset.pattern.permute.xlu0 0
    %241 = vperm.xlu0 %240, %v211
    %v242 = vpop.permute.xlu0 %241
    %245 = vset.pattern.permute.xlu0 0
    %246 = vperm.xlu0 %245, %v212
    %v247 = vpop.permute.xlu0 %246
    %250 = vset.pattern.permute.xlu0 0
    %251 = vperm.xlu0 %250, %v213
    %v252 = vpop.permute.xlu0 %251
    %v254 = vadd.f32 %v198, %v217
    %v255 = vadd.f32 %v199, %v222
    %v256 = vadd.f32 %v200, %v227
    %v257 = vadd.f32 %v201, %v232
    %v258 = vadd.f32 %v202, %v237
    %v259 = vadd.f32 %v203, %v242
    %v260 = vadd.f32 %v204, %v247
    %v261 = vadd.f32 %v205, %v252
    %v262 = vmax.f32 %v254, 0.0
    %v263 = vmax.f32 %v255, 0.0
    %v264 = vmax.f32 %v256, 0.0
    %v265 = vmax.f32 %v257, 0.0
    %v266 = vmax.f32 %v258, 0.0
    %v267 = vmax.f32 %v259, 0.0
    %v268 = vmax.f32 %v260, 0.0
    %v269 = vmax.f32 %v261, 0.0
    %v270 = vld [vmem:[%s4] sm:$0xff]
    %v271 = vld [vmem:[%s4 + $0x8] sm:$0xff]
    %v272 = vld [vmem:[%s4 + $0x10] sm:$0xff]
    %v273 = vld [vmem:[%s4 + $0x18] sm:$0xff]
    %v274 = vld [vmem:[%s4 + $0x20] sm:$0xff]
    %v275 = vld [vmem:[%s4 + $0x28] sm:$0xff]
    %v276 = vld [vmem:[%s4 + $0x30] sm:$0xff]
    %v277 = vld [vmem:[%s4 + $0x38] sm:$0xff]
    %v278 = vld [vmem:[%s1] sm:$0x1]
    %280 = vset.pattern.permute.xlu0 0
    %281 = vperm.xlu0 %280, %v270
    %v282 = vpop.permute.xlu0 %281
    %285 = vset.pattern.permute.xlu0 0
    %286 = vperm.xlu0 %285, %v271
    %v287 = vpop.permute.xlu0 %286
    %290 = vset.pattern.permute.xlu0 0
    %291 = vperm.xlu0 %290, %v272
    %v292 = vpop.permute.xlu0 %291
    %295 = vset.pattern.permute.xlu0 0
    %296 = vperm.xlu0 %295, %v273
    %v297 = vpop.permute.xlu0 %296
    %300 = vset.pattern.permute.xlu0 0
    %301 = vperm.xlu0 %300, %v274
    %v302 = vpop.permute.xlu0 %301
    %305 = vset.pattern.permute.xlu0 0
    %306 = vperm.xlu0 %305, %v275
    %v307 = vpop.permute.xlu0 %306
    %310 = vset.pattern.permute.xlu0 0
    %311 = vperm.xlu0 %310, %v276
    %v312 = vpop.permute.xlu0 %311
    %315 = vset.pattern.permute.xlu0 0
    %316 = vperm.xlu0 %315, %v277
    %v317 = vpop.permute.xlu0 %316
    %v320 = vlaneseq
    %v321 = vshrl.u32 %v320, 7
    %v322 = vsub.s32 0, %v321
    %v323 = vrot.slane %v278, %v322
    %v325 = vmul.f32 %v282, %v323
    %v326 = vmul.f32 %v287, %v323
    %v327 = vmul.f32 %v292, %v323
    %v328 = vmul.f32 %v297, %v323
    %v329 = vmul.f32 %v302, %v323
    %v330 = vmul.f32 %v307, %v323
    %v331 = vmul.f32 %v312, %v323
    %v332 = vmul.f32 %v317, %v323
    %v333 = vld [vmem:[%s5] sm:$0xff]
    %v334 = vld [vmem:[%s5 + $0x8] sm:$0xff]
    %v335 = vld [vmem:[%s5 + $0x10] sm:$0xff]
    %v336 = vld [vmem:[%s5 + $0x18] sm:$0xff]
    %v337 = vld [vmem:[%s5 + $0x20] sm:$0xff]
    %v338 = vld [vmem:[%s5 + $0x28] sm:$0xff]
    %v339 = vld [vmem:[%s5 + $0x30] sm:$0xff]
    %v340 = vld [vmem:[%s5 + $0x38] sm:$0xff]
    %342 = vset.pattern.permute.xlu0 0
    %343 = vperm.xlu0 %342, %v333
    %v344 = vpop.permute.xlu0 %343
    %347 = vset.pattern.permute.xlu0 0
    %348 = vperm.xlu0 %347, %v334
    %v349 = vpop.permute.xlu0 %348
    %352 = vset.pattern.permute.xlu0 0
    %353 = vperm.xlu0 %352, %v335
    %v354 = vpop.permute.xlu0 %353
    %357 = vset.pattern.permute.xlu0 0
    %358 = vperm.xlu0 %357, %v336
    %v359 = vpop.permute.xlu0 %358
    %362 = vset.pattern.permute.xlu0 0
    %363 = vperm.xlu0 %362, %v337
    %v364 = vpop.permute.xlu0 %363
    %367 = vset.pattern.permute.xlu0 0
    %368 = vperm.xlu0 %367, %v338
    %v369 = vpop.permute.xlu0 %368
    %372 = vset.pattern.permute.xlu0 0
    %373 = vperm.xlu0 %372, %v339
    %v374 = vpop.permute.xlu0 %373
    %377 = vset.pattern.permute.xlu0 0
    %378 = vperm.xlu0 %377, %v340
    %v379 = vpop.permute.xlu0 %378
    %v381 = vadd.f32 %v325, %v344
    %v382 = vadd.f32 %v326, %v349
    %v383 = vadd.f32 %v327, %v354
    %v384 = vadd.f32 %v328, %v359
    %v385 = vadd.f32 %v329, %v364
    %v386 = vadd.f32 %v330, %v369
    %v387 = vadd.f32 %v331, %v374
    %v388 = vadd.f32 %v332, %v379
    %v389 = vmax.f32 %v381, 0.0
    %v390 = vmax.f32 %v382, 0.0
    %v391 = vmax.f32 %v383, 0.0
    %v392 = vmax.f32 %v384, 0.0
    %v393 = vmax.f32 %v385, 0.0
    %v394 = vmax.f32 %v386, 0.0
    %v395 = vmax.f32 %v387, 0.0
    %v396 = vmax.f32 %v388, 0.0
    %v397 = vld [vmem:[%s6] sm:$0xff]
    %v398 = vld [vmem:[%s6 + $0x8] sm:$0xff]
    %v399 = vld [vmem:[%s6 + $0x10] sm:$0xff]
    %v400 = vld [vmem:[%s6 + $0x18] sm:$0xff]
    %v401 = vld [vmem:[%s7] sm:$0xff]
    %v402 = vld [vmem:[%s7 + $0x8] sm:$0xff]
    %v403 = vld [vmem:[%s7 + $0x10] sm:$0xff]
    %v404 = vld [vmem:[%s7 + $0x18] sm:$0xff]
    %vm405 = vcmask 523264
    %v407 = vsel %vm405, %v401, 0
    %v410 = vsel %vm405, %v402, 0
    %v413 = vsel %vm405, %v403, 0
    %v416 = vsel %vm405, %v404, 0
    %418 = vmatprep.subr.mxu0 0.0
    %419 = vmatpush1.msra.mxu0 %v389
    %420 = vmatprep.subr.mxu0 0.0
    %421 = vmatpush1.msra.mxu0 %v390
    %422 = vmatprep.subr.mxu0 0.0
    %423 = vmatpush1.msra.mxu0 %v391
    %424 = vmatprep.subr.mxu0 0.0
    %425 = vmatpush1.msra.mxu0 %v392
    %426 = vmatprep.subr.mxu0 0.0
    %427 = vmatpush1.msra.mxu0 %v393
    %428 = vmatprep.subr.mxu0 0.0
    %429 = vmatpush1.msra.mxu0 %v394
    %430 = vmatprep.subr.mxu0 0.0
    %431 = vmatpush1.msra.mxu0 %v395
    %432 = vmatprep.subr.mxu0 0.0
    %433 = vmatpush1.msra.mxu0 %v396
    %434 = vmatprep.subr.mxu0 0.0
    %435 = vmatpush1.msra.mxu0 0.0
    %436 = vmatprep.subr.mxu0 0.0
    %437 = vmatpush1.msra.mxu0 0.0
    %438 = vmatprep.subr.mxu0 0.0
    %439 = vmatpush1.msra.mxu0 0.0
    %440 = vmatprep.subr.mxu0 0.0
    %441 = vmatpush1.msra.mxu0 0.0
    %442 = vmatprep.subr.mxu0 0.0
    %443 = vmatpush1.msra.mxu0 0.0
    %444 = vmatprep.subr.mxu0 0.0
    %445 = vmatpush1.msra.mxu0 0.0
    %446 = vmatprep.subr.mxu0 0.0
    %447 = vmatpush1.msra.mxu0 0.0
    %448 = vmatprep.subr.mxu0 0.0
    %449 = vmatpush1.msra.mxu0 0.0
    %450 = vmatprep.subr.mxu0 0.0
    %451 = vmatpush1.msra.mxu0 0.0
    %452 = vmatprep.subr.mxu0 0.0
    %453 = vmatpush1.msra.mxu0 0.0
    %454 = vmatprep.subr.mxu0 0.0
    %455 = vmatpush1.msra.mxu0 0.0
    %456 = vmatprep.subr.mxu0 0.0
    %457 = vmatpush1.msra.mxu0 0.0
    %458 = vmatprep.subr.mxu0 0.0
    %459 = vmatpush1.msra.mxu0 0.0
    %460 = vmatprep.subr.mxu0 0.0
    %461 = vmatpush1.msra.mxu0 0.0
    %462 = vmatprep.subr.mxu0 0.0
    %463 = vmatpush1.msra.mxu0 0.0
    %464 = vmatprep.subr.mxu0 0.0
    %465 = vmatpush1.msra.mxu0 0.0
    %466 = vmatprep.subr.mxu0 0.0
    %467 = vmatpush1.msra.mxu0 0.0
    %468 = vmatprep.subr.mxu0 0.0
    %469 = vmatpush1.msra.mxu0 0.0
    %470 = vmatprep.subr.mxu0 0.0
    %471 = vmatpush1.msra.mxu0 0.0
    %472 = vmatprep.subr.mxu0 0.0
    %473 = vmatpush1.msra.mxu0 0.0
    %474 = vmatprep.subr.mxu0 0.0
    %475 = vmatpush1.msra.mxu0 0.0
    %476 = vmatprep.subr.mxu0 0.0
    %477 = vmatpush1.msra.mxu0 0.0
    %478 = vmatprep.subr.mxu0 0.0
    %479 = vmatpush1.msra.mxu0 0.0
    %480 = vmatprep.subr.mxu0 0.0
    %481 = vmatpush1.msra.mxu0 0.0
    %482 = vmatprep.mubr.f32.mxu0 0.0
    %483 = vmatmul.mubr.f32.gmra.mrb[0].mxu0 %v407
    %v484 = vpop.f32.mrb[0].mxu0
    %v485 = vadd.f32 0.0, %v484
    %v486 = vpop.f32.mrb[0].mxu0
    %487 = vmatprep.mubr.f32.mxu0 0.0
    %488 = vmatmul.mubr.f32.gmra.mrb[0].mxu0 %v410
    %v489 = vpop.f32.mrb[0].mxu0
    %v490 = vadd.f32 0.0, %v489
    %v491 = vpop.f32.mrb[0].mxu0
    %492 = vmatprep.mubr.f32.mxu0 0.0
    %493 = vmatmul.mubr.f32.gmra.mrb[0].mxu0 %v413
    %v494 = vpop.f32.mrb[0].mxu0
    %v495 = vadd.f32 0.0, %v494
    %v496 = vpop.f32.mrb[0].mxu0
    %497 = vmatprep.mubr.f32.mxu0 0.0
    %498 = vmatmul.mubr.f32.gmra.mrb[0].mxu0 %v416
    %v499 = vpop.f32.mrb[0].mxu0
    %v500 = vadd.f32 0.0, %v499
    %v501 = vpop.f32.mrb[0].mxu0
    %502 = vdwg.mxu0
    %v504 = vsel %vm405, %v397, 0
    %v507 = vsel %vm405, %v398, 0
    %v510 = vsel %vm405, %v399, 0
    %v513 = vsel %vm405, %v400, 0
    %515 = vmatprep.subr.mxu0 0.0
    %516 = vmatpush1.msra.mxu0 %v262
    %517 = vmatprep.subr.mxu0 0.0
    %518 = vmatpush1.msra.mxu0 %v263
    %519 = vmatprep.subr.mxu0 0.0
    %520 = vmatpush1.msra.mxu0 %v264
    %521 = vmatprep.subr.mxu0 0.0
    %522 = vmatpush1.msra.mxu0 %v265
    %523 = vmatprep.subr.mxu0 0.0
    %524 = vmatpush1.msra.mxu0 %v266
    %525 = vmatprep.subr.mxu0 0.0
    %526 = vmatpush1.msra.mxu0 %v267
    %527 = vmatprep.subr.mxu0 0.0
    %528 = vmatpush1.msra.mxu0 %v268
    %529 = vmatprep.subr.mxu0 0.0
    %530 = vmatpush1.msra.mxu0 %v269
    %531 = vmatprep.subr.mxu0 0.0
    %532 = vmatpush1.msra.mxu0 0.0
    %533 = vmatprep.subr.mxu0 0.0
    %534 = vmatpush1.msra.mxu0 0.0
    %535 = vmatprep.subr.mxu0 0.0
    %536 = vmatpush1.msra.mxu0 0.0
    %537 = vmatprep.subr.mxu0 0.0
    %538 = vmatpush1.msra.mxu0 0.0
    %539 = vmatprep.subr.mxu0 0.0
    %540 = vmatpush1.msra.mxu0 0.0
    %541 = vmatprep.subr.mxu0 0.0
    %542 = vmatpush1.msra.mxu0 0.0
    %543 = vmatprep.subr.mxu0 0.0
    %544 = vmatpush1.msra.mxu0 0.0
    %545 = vmatprep.subr.mxu0 0.0
    %546 = vmatpush1.msra.mxu0 0.0
    %547 = vmatprep.subr.mxu0 0.0
    %548 = vmatpush1.msra.mxu0 0.0
    %549 = vmatprep.subr.mxu0 0.0
    %550 = vmatpush1.msra.mxu0 0.0
    %551 = vmatprep.subr.mxu0 0.0
    %552 = vmatpush1.msra.mxu0 0.0
    %553 = vmatprep.subr.mxu0 0.0
    %554 = vmatpush1.msra.mxu0 0.0
    %555 = vmatprep.subr.mxu0 0.0
    %556 = vmatpush1.msra.mxu0 0.0
    %557 = vmatprep.subr.mxu0 0.0
    %558 = vmatpush1.msra.mxu0 0.0
    %559 = vmatprep.subr.mxu0 0.0
    %560 = vmatpush1.msra.mxu0 0.0
    %561 = vmatprep.subr.mxu0 0.0
    %562 = vmatpush1.msra.mxu0 0.0
    %563 = vmatprep.subr.mxu0 0.0
    %564 = vmatpush1.msra.mxu0 0.0
    %565 = vmatprep.subr.mxu0 0.0
    %566 = vmatpush1.msra.mxu0 0.0
    %567 = vmatprep.subr.mxu0 0.0
    %568 = vmatpush1.msra.mxu0 0.0
    %569 = vmatprep.subr.mxu0 0.0
    %570 = vmatpush1.msra.mxu0 0.0
    %571 = vmatprep.subr.mxu0 0.0
    %572 = vmatpush1.msra.mxu0 0.0
    %573 = vmatprep.subr.mxu0 0.0
    %574 = vmatpush1.msra.mxu0 0.0
    %575 = vmatprep.subr.mxu0 0.0
    %576 = vmatpush1.msra.mxu0 0.0
    %577 = vmatprep.subr.mxu0 0.0
    %578 = vmatpush1.msra.mxu0 0.0
    %579 = vmatprep.mubr.f32.mxu0 0.0
    %580 = vmatmul.mubr.f32.gmra.mrb[0].mxu0 %v504
    %v581 = vpop.f32.mrb[0].mxu0
    %v582 = vadd.f32 %v485, %v581
    %v583 = vpop.f32.mrb[0].mxu0
    %584 = vmatprep.mubr.f32.mxu0 0.0
    %585 = vmatmul.mubr.f32.gmra.mrb[0].mxu0 %v507
    %v586 = vpop.f32.mrb[0].mxu0
    %v587 = vadd.f32 %v490, %v586
    %v588 = vpop.f32.mrb[0].mxu0
    %589 = vmatprep.mubr.f32.mxu0 0.0
    %590 = vmatmul.mubr.f32.gmra.mrb[0].mxu0 %v510
    %v591 = vpop.f32.mrb[0].mxu0
    %v592 = vadd.f32 %v495, %v591
    %v593 = vpop.f32.mrb[0].mxu0
    %594 = vmatprep.mubr.f32.mxu0 0.0
    %595 = vmatmul.mubr.f32.gmra.mrb[0].mxu0 %v513
    %v596 = vpop.f32.mrb[0].mxu0
    %v597 = vadd.f32 %v500, %v596
    %v598 = vpop.f32.mrb[0].mxu0
    %599 = vdwg.mxu0
    %v600 = vld [vmem:[%s8] sm:$0xff]
    %v601 = vld [vmem:[%s8 + $0x8] sm:$0xff]
    %v602 = vld [vmem:[%s8 + $0x10] sm:$0xff]
    %v603 = vld [vmem:[%s8 + $0x18] sm:$0xff]
    %605 = vset.pattern.permute.xlu0 0
    %606 = vperm.xlu0 %605, %v600
    %v607 = vpop.permute.xlu0 %606
    %610 = vset.pattern.permute.xlu0 0
    %611 = vperm.xlu0 %610, %v601
    %v612 = vpop.permute.xlu0 %611
    %615 = vset.pattern.permute.xlu0 0
    %616 = vperm.xlu0 %615, %v602
    %v617 = vpop.permute.xlu0 %616
    %620 = vset.pattern.permute.xlu0 0
    %621 = vperm.xlu0 %620, %v603
    %v622 = vpop.permute.xlu0 %621
    %v624 = vadd.f32 %v582, %v607
    %v625 = vadd.f32 %v587, %v612
    %v626 = vadd.f32 %v592, %v617
    %v627 = vadd.f32 %v597, %v622
    %v628 = vmax.f32 %v624, 0.0
    %v629 = vmax.f32 %v625, 0.0
    %v630 = vmax.f32 %v626, 0.0
    %v631 = vmax.f32 %v627, 0.0
    %v632 = vld [vmem:[%s9] sm:$0xff]
    %v633 = vld [vmem:[%s9 + $0x8] sm:$0xff]
    %v634 = vld [vmem:[%s9 + $0x10] sm:$0xff]
    %v635 = vld [vmem:[%s9 + $0x18] sm:$0xff]
    %637 = vset.pattern.permute.xlu0 0
    %638 = vperm.xlu0 %637, %v632
    %v639 = vpop.permute.xlu0 %638
    %642 = vset.pattern.permute.xlu0 0
    %643 = vperm.xlu0 %642, %v633
    %v644 = vpop.permute.xlu0 %643
    %647 = vset.pattern.permute.xlu0 0
    %648 = vperm.xlu0 %647, %v634
    %v649 = vpop.permute.xlu0 %648
    %652 = vset.pattern.permute.xlu0 0
    %653 = vperm.xlu0 %652, %v635
    %v654 = vpop.permute.xlu0 %653
    %v656 = vmul.f32 %v628, %v639
    %v657 = vmul.f32 %v629, %v644
    %v658 = vmul.f32 %v630, %v649
    %v659 = vmul.f32 %v631, %v654
    %v660 = vadd.f32 %v656, %v657
    %v661 = vadd.f32 %v660, %v658
    %v662 = vadd.f32 %v661, %v659
    %v663 = vrot.slane %v662, 4
    %v664 = vadd.f32 %v662, %v663
    %v665 = vrot.slane %v664, 2
    %v666 = vadd.f32 %v664, %v665
    %v667 = vrot.slane %v666, 1
    %v668 = vadd.f32 %v666, %v667
    %v669 = vld [vmem:[#allocation2] sm:$0x1]
    %671 = vset.pattern.permute.xlu0 0
    %672 = vperm.xlu0 %671, %v669
    %v673 = vpop.permute.xlu0 %672
    %v675 = vlaneseq
    %v676 = vshrl.u32 %v675, 7
    %v677 = vsub.s32 0, %v676
    %v678 = vrot.slane %v673, %v677
    %v679 = vadd.f32 %v668, %v678
    %680 = vst [vmem:[#allocation3] sm:$0x1] %v679
    // Predicated region
    $region46: #{tpu_custom_call.1} parent=1 // pred_check
      _
    $region47: #{tpu_custom_call.1} parent=1 // pred_check_branch
      %682 = sbr.rel (0) target = $region49
    $region48: #{tpu_custom_call.1} parent=1 // pred_region
      %s684 = ssub.s32 16, 16
      %685 = vsyncadd [#allocation4], %s684
      %s687 = sshll.u32 [#allocation3], 4
      %s688 = int_to_ptr.vmem [resolvable:$true] %s687
      %690 = dma.vmem_to_hbm [thread:$0]  %s688, 16, %s11, [#allocation4]
    $region49: #{tpu_custom_call.1} parent=1 // pred_fallthru
      _
    // Predicated region
    $region50: #{tpu_custom_call.1} parent=1 // pred_check
      _
    $region51: #{tpu_custom_call.1} parent=1 // pred_check_branch
      %692 = sbr.rel (0) target = $region53
    $region52: #{tpu_custom_call.1} parent=1 // pred_region
      %693 = dma.done [#allocation4], 16
    $region53: #{tpu_custom_call.1} parent=1 // pred_fallthru
      _
    %694 = vsyncpa [#allocation4], 1

</llo_original>
